<compile_context>
chip_gen: v7x
topology: tpu7x:2x2x1
jax: 0.10.0
libtpu: 0.0.40
codegen_flags: <defaults>
</compile_context>

<pallas_src>
import functools

import jax
import jax.numpy as jnp
from jax.experimental import pallas as pl
from jax.experimental.pallas import tpu as pltpu

LANE = 128
SUBLANE = 8
SCRATCH_RESERVE = 4 << 20  # Mosaic internal scratch headroom


def _round_up(x, m):
    return ((x + m - 1) // m) * m


def _device_kind():
    try:
        return jax.devices()[0].device_kind.lower()
    except Exception:
        return ""


def _vmem_capacity_bytes():
    try:
        cap = getattr(pltpu.get_tpu_info(), "vmem_capacity_bytes", None)
        if cap:
            return int(cap)
    except Exception:
        pass
    kind = _device_kind()
    if "v7" in kind or "7x" in kind:
        return 64 << 20
    return 128 << 20


def _vmem_budget_bytes():
    # Keep ~15% headroom below physical per-TC VMEM.
    return int(0.85 * _vmem_capacity_bytes())


def _has_256_mxu():
    kind = _device_kind()
    return ("v6" in kind) or ("v7" in kind) or ("7x" in kind)


# --------------------------------------------------------------------------
# Fused resident-weight kernel (all 5 layers in one body).
# --------------------------------------------------------------------------
def ffnn_fused_kernel(x_ref,
                      w1_ref, b1_ref,
                      w2_ref, b2_ref,
                      w3_ref, b3_ref,
                      w4_ref, b4_ref,
                      w5_ref, b5_ref,
                      o_ref):
    """x: [tile_b, in_p] (f32 or bf16); Wk: bf16 [in, out]; bk: f32 [1, out]."""

    def layer(h_bf16, w_ref, b_ref, relu):
        acc = jnp.dot(h_bf16, w_ref[...], preferred_element_type=jnp.float32)
        acc = acc + b_ref[...]                 # (1, out) broadcast, f32 VPU
        if relu:
            acc = jnp.maximum(acc, 0.0)
        return acc

    h = x_ref[...].astype(jnp.bfloat16)        # free cast under MXU slack
    h = layer(h, w1_ref, b1_ref, True).astype(jnp.bfloat16)
    h = layer(h, w2_ref, b2_ref, True).astype(jnp.bfloat16)
    h = layer(h, w3_ref, b3_ref, True).astype(jnp.bfloat16)
    h = layer(h, w4_ref, b4_ref, True).astype(jnp.bfloat16)
    out = layer(h, w5_ref, b5_ref, False)      # f32 accumulation, final layer
    o_ref[...] = out.astype(o_ref.dtype)


# --------------------------------------------------------------------------
# Streaming fallback: one tiled matmul+bias(+ReLU) per layer.
# --------------------------------------------------------------------------
def _linear_kernel(x_ref, w_ref, b_ref, o_ref, acc_ref, *, relu):
    @pl.when(pl.program_id(2) == 0)
    def _():
        acc_ref[...] = jnp.zeros_like(acc_ref)

    acc_ref[...] += jnp.dot(x_ref[...].astype(jnp.bfloat16), w_ref[...],
                            preferred_element_type=jnp.float32)

    @pl.when(pl.program_id(2) == pl.num_programs(2) - 1)
    def _():
        out = acc_ref[...] + b_ref[...]
        if relu:
            out = jnp.maximum(out, 0.0)
        o_ref[...] = out.astype(o_ref.dtype)


def _pick_tile(dim, preferred):
    for t in (preferred, 512, 256, 128):
        if t <= dim and dim % t == 0:
            return t
    return dim


def _streamed_linear(x, w, b, *, relu, out_dtype, tm, vmem_limit):
    M, K = x.shape
    _, N = w.shape
    tn = _pick_tile(N, 512)
    tk = _pick_tile(K, 512)
    grid = (M // tm, N // tn, K // tk)

    return pl.pallas_call(
        functools.partial(_linear_kernel, relu=relu),
        out_shape=jax.ShapeDtypeStruct((M, N), out_dtype),
        grid_spec=pltpu.PrefetchScalarGridSpec(
            num_scalar_prefetch=0,
            grid=grid,
            in_specs=[
                pl.BlockSpec((tm, tk), lambda i, j, k: (i, k)),
                pl.BlockSpec((tk, tn), lambda i, j, k: (k, j)),
                pl.BlockSpec((1, tn), lambda i, j, k: (0, j)),
            ],
            out_specs=pl.BlockSpec((tm, tn), lambda i, j, k: (i, j)),
            scratch_shapes=[pltpu.VMEM((tm, tn), jnp.float32)],
        ),
        compiler_params=pltpu.CompilerParams(
            dimension_semantics=("parallel", "parallel", "arbitrary"),
            vmem_limit_bytes=vmem_limit,
        ),
    )(x, w, b)


# --------------------------------------------------------------------------
# Wrapper
# --------------------------------------------------------------------------
def feed_forward_nn(x, params, *, tile_b=None, feature_align=None,
                    out_dtype=jnp.float32, force_streaming=False):
    """x: [B, inputDim] f32. params: W1..W5 stored [in, out], b1..b5 [1, out]."""
    B, in_dim = x.shape
    hid_dim = params["W1"].shape[1]
    out_dim = params["W5"].shape[1]

    vmem_budget = _vmem_budget_bytes()
    wide_mxu = _has_256_mxu()

    def align_for(d):
        if feature_align is not None:
            return _round_up(d, feature_align)
        a = 256 if (wide_mxu and d >= 256) else LANE
        return _round_up(d, a)

    in_p = align_for(in_dim)
    hid_p = align_for(hid_dim)
    out_p = align_for(out_dim)

    # ---- setup-time weight padding / dtype prep (plain XLA, outside kernel)
    def pad2(a, rows, cols):
        return jnp.pad(a, ((0, rows - a.shape[0]), (0, cols - a.shape[1])))

    layer_dims = [(in_p, hid_p), (hid_p, hid_p), (hid_p, hid_p),
                  (hid_p, hid_p), (hid_p, out_p)]
    ws, bs = [], []
    for k, (din, dout) in enumerate(layer_dims, start=1):
        ws.append(pad2(params[f"W{k}"], din, dout).astype(jnp.bfloat16))
        bs.append(pad2(params[f"b{k}"], 1, dout).astype(jnp.float32))
    weight_bytes = sum(int(a.size) * a.dtype.itemsize for a in ws + bs)

    out_itemsize = jnp.dtype(out_dtype).itemsize
    # Live set per batch row inside the fused body: f32 acc + bf16 activation
    # on the hidden dim, f32 final acc, plus double-buffered I/O tiles.
    per_row = (2 * in_p * 4            # double-buffered input tile (f32 worst case)
               + 2 * out_p * out_itemsize  # double-buffered output tile
               + 6 * hid_p              # f32 acc (4B) + bf16 act (2B)
               + 4 * out_p)             # final-layer f32 acc
    avail = vmem_budget - weight_bytes - SCRATCH_RESERVE
    fits_resident = (not force_streaming) and avail >= SUBLANE * per_row

    # =====================================================================
    # Streaming fallback: weights too large to keep resident in VMEM.
    # =====================================================================
    if not fits_resident:
        tm = min(256, _round_up(B, SUBLANE))
        B_p = _round_up(B, tm)
        h = pad2(x, B_p, in_p).astype(jnp.float32)
        vmem_limit = vmem_budget
        for k in range(4):
            h = _streamed_linear(h, ws[k], bs[k], relu=True,
                                 out_dtype=jnp.bfloat16, tm=tm,
                                 vmem_limit=vmem_limit)
        out_padded = _streamed_linear(h, ws[4], bs[4], relu=False,
                                      out_dtype=out_dtype, tm=tm,
                                      vmem_limit=vmem_limit)
        if B_p == B and out_p == out_dim:
            return out_padded
        return out_padded[:B, :out_dim]

    # =====================================================================
    # Fused resident-weight path.
    # =====================================================================
    if tile_b is None:
        tile_b_max = (avail // per_row) // SUBLANE * SUBLANE
        tile_b_max = max(SUBLANE, min(1024, int(tile_b_max)))
        tile_b = min(tile_b_max, _round_up(B, SUBLANE))
    tile_b = max(SUBLANE, _round_up(tile_b, SUBLANE))
    B_p = _round_up(B, tile_b)
    n_b = B_p // tile_b

    need_pad = (B_p != B) or (in_p != in_dim)
    if need_pad:
        # Padding materializes a copy anyway -> fold the bf16 cast in.
        x_in = pad2(x, B_p, in_p).astype(jnp.bfloat16)
    else:
        x_in = x  # f32; cast to bf16 inside the kernel

    x_spec = pl.BlockSpec((tile_b, in_p), lambda i: (i, 0))
    out_spec = pl.BlockSpec((tile_b, out_p), lambda i: (i, 0))

    def resident_spec(arr):
        # Constant block index across the grid -> single-buffer it.
        return pl.BlockSpec(arr.shape, lambda i: (0, 0),
                            pipeline_mode=pl.Buffered(1))

    in_specs = [x_spec]
    args = [x_in]
    for w, b in zip(ws, bs):
        in_specs += [resident_spec(w), resident_spec(b)]
        args += [w, b]

    act_bytes = tile_b * per_row
    vmem_limit = int(min(max(weight_bytes + act_bytes + SCRATCH_RESERVE,
                             16 << 20),
                         vmem_budget))

    out_padded = pl.pallas_call(
        ffnn_fused_kernel,
        out_shape=jax.ShapeDtypeStruct((B_p, out_p), out_dtype),
        grid_spec=pltpu.PrefetchScalarGridSpec(
            num_scalar_prefetch=0,
            grid=(n_b,),
            in_specs=in_specs,
            out_specs=out_spec,
        ),
        compiler_params=pltpu.CompilerParams(
            # Single tile (small / weight-DMA-bound batch): keep one TC on it
            # so the resident weights are only fetched once from HBM.
            dimension_semantics=("parallel",) if n_b > 1 else ("arbitrary",),
            vmem_limit_bytes=vmem_limit,
        ),
    )(*args)

    if B_p == B and out_p == out_dim:
        return out_padded
    return out_padded[:B, :out_dim]


# --------------------------------------------------------------------------
# Parameter init / reference
# --------------------------------------------------------------------------
def init_params(key, input_dim, hidden_dim, output_dim):
    """Deterministic init matching nn.Linear shapes; weights stored as [in, out]."""
    dims = [(input_dim, hidden_dim),
            (hidden_dim, hidden_dim),
            (hidden_dim, hidden_dim),
            (hidden_dim, hidden_dim),
            (hidden_dim, output_dim)]
    params = {}
    for idx, (din, dout) in enumerate(dims, start=1):
        key, kw, kb = jax.random.split(key, 3)
        bound = 1.0 / jnp.sqrt(din)
        # PyTorch nn.Linear: weight [dout, din]; we store transposed [din, dout].
        params[f"W{idx}"] = jax.random.uniform(kw, (din, dout), jnp.float32,
                                               -bound, bound)
        params[f"b{idx}"] = jax.random.uniform(kb, (1, dout), jnp.float32,
                                               -bound, bound)
    return params


def reference(x, params):
    h = x
    for k in range(1, 5):
        h = jnp.maximum(h @ params[f"W{k}"] + params[f"b{k}"], 0.0)
    return h @ params["W5"] + params["b5"]


if __name__ == "__main__":
    key = jax.random.PRNGKey(0)
    B, input_dim, hidden_dim, output_dim = 8, 16, 32, 8

    key, kx = jax.random.split(key)
    x = jax.random.normal(kx, (B, input_dim), jnp.float32)
    params = init_params(key, input_dim, hidden_dim, output_dim)
    ref = reference(x, params)

    # Fused resident-weight path.
    out = jax.block_until_ready(feed_forward_nn(x, params))
    assert out.shape == (B, output_dim)
    # bf16 weights/activations with f32 accumulation -> loosened tolerance.
    assert jnp.allclose(out, ref, atol=5e-2, rtol=5e-2)

    # Streaming fallback path (exercised explicitly at toy size).
    out_s = jax.block_until_ready(
        feed_forward_nn(x, params, force_streaming=True))
    assert out_s.shape == (B, output_dim)
    assert jnp.allclose(out_s, ref, atol=5e-2, rtol=5e-2)

    print("KERNEL_OK")
</pallas_src>

<mosaic_0001>
module attributes {stable_mosaic.version = 11 : i64} {
  func.func @ffnn_fused_kernel(%arg0: i32, %arg1: memref<8x128xbf16, #tpu.memory_space<vmem>>, %arg2: memref<128x128xbf16, #tpu.memory_space<vmem>>, %arg3: memref<1x128xf32, #tpu.memory_space<vmem>>, %arg4: memref<128x128xbf16, #tpu.memory_space<vmem>>, %arg5: memref<1x128xf32, #tpu.memory_space<vmem>>, %arg6: memref<128x128xbf16, #tpu.memory_space<vmem>>, %arg7: memref<1x128xf32, #tpu.memory_space<vmem>>, %arg8: memref<128x128xbf16, #tpu.memory_space<vmem>>, %arg9: memref<1x128xf32, #tpu.memory_space<vmem>>, %arg10: memref<128x128xbf16, #tpu.memory_space<vmem>>, %arg11: memref<1x128xf32, #tpu.memory_space<vmem>>, %arg12: memref<8x128xf32, #tpu.memory_space<vmem>>) attributes {dimension_semantics = [#tpu.dimension_semantics<arbitrary>], iteration_bounds = array<i64: 1>, scalar_prefetch = 0 : i64, scratch_operands = 0 : i64, tpu.core_type = #tpu.core_type<tc>, window_params = [{transform_indices = @transform_0, window_bounds = array<i64: 8, 128>}, {pipeline_mode = #tpu.pipeline_mode<synchronous>, transform_indices = @transform_1, window_bounds = array<i64: 128, 128>}, {pipeline_mode = #tpu.pipeline_mode<synchronous>, transform_indices = @transform_2, window_bounds = array<i64: 1, 128>}, {pipeline_mode = #tpu.pipeline_mode<synchronous>, transform_indices = @transform_3, window_bounds = array<i64: 128, 128>}, {pipeline_mode = #tpu.pipeline_mode<synchronous>, transform_indices = @transform_4, window_bounds = array<i64: 1, 128>}, {pipeline_mode = #tpu.pipeline_mode<synchronous>, transform_indices = @transform_5, window_bounds = array<i64: 128, 128>}, {pipeline_mode = #tpu.pipeline_mode<synchronous>, transform_indices = @transform_6, window_bounds = array<i64: 1, 128>}, {pipeline_mode = #tpu.pipeline_mode<synchronous>, transform_indices = @transform_7, window_bounds = array<i64: 128, 128>}, {pipeline_mode = #tpu.pipeline_mode<synchronous>, transform_indices = @transform_8, window_bounds = array<i64: 1, 128>}, {pipeline_mode = #tpu.pipeline_mode<synchronous>, transform_indices = @transform_9, window_bounds = array<i64: 128, 128>}, {pipeline_mode = #tpu.pipeline_mode<synchronous>, transform_indices = @transform_10, window_bounds = array<i64: 1, 128>}, {transform_indices = @transform_11, window_bounds = array<i64: 8, 128>}]} {
    %c0 = arith.constant 0 : index
    %c0_0 = arith.constant 0 : index
    %0 = vector.load %arg1[%c0, %c0_0] : memref<8x128xbf16, #tpu.memory_space<vmem>>, vector<8x128xbf16>
    %c0_1 = arith.constant 0 : index
    %c0_2 = arith.constant 0 : index
    %1 = vector.load %arg2[%c0_1, %c0_2] : memref<128x128xbf16, #tpu.memory_space<vmem>>, vector<128x128xbf16>
    %cst = arith.constant dense<0.000000e+00> : vector<8x128xf32>
    %2 = tpu.matmul %0, %1, %cst {dimension_numbers = #tpu.dot_dimension_numbers<[1], [0], [0], [1], [0, 0, 1, 1], [], []>} : vector<8x128xbf16>, vector<128x128xbf16>, vector<8x128xf32> -> vector<8x128xf32>
    %c0_3 = arith.constant 0 : index
    %c0_4 = arith.constant 0 : index
    %3 = vector.load %arg3[%c0_3, %c0_4] : memref<1x128xf32, #tpu.memory_space<vmem>>, vector<1x128xf32>
    %4 = vector.broadcast %3 : vector<1x128xf32> to vector<8x128xf32>
    %5 = arith.addf %2, %4 : vector<8x128xf32>
    %cst_5 = arith.constant 0.000000e+00 : f32
    %6 = vector.broadcast %cst_5 : f32 to vector<8x128xf32>
    %7 = arith.maximumf %5, %6 : vector<8x128xf32>
    %8 = arith.truncf %7 : vector<8x128xf32> to vector<8x128xbf16>
    %c0_6 = arith.constant 0 : index
    %c0_7 = arith.constant 0 : index
    %9 = vector.load %arg4[%c0_6, %c0_7] : memref<128x128xbf16, #tpu.memory_space<vmem>>, vector<128x128xbf16>
    %cst_8 = arith.constant dense<0.000000e+00> : vector<8x128xf32>
    %10 = tpu.matmul %8, %9, %cst_8 {dimension_numbers = #tpu.dot_dimension_numbers<[1], [0], [0], [1], [0, 0, 1, 1], [], []>} : vector<8x128xbf16>, vector<128x128xbf16>, vector<8x128xf32> -> vector<8x128xf32>
    %c0_9 = arith.constant 0 : index
    %c0_10 = arith.constant 0 : index
    %11 = vector.load %arg5[%c0_9, %c0_10] : memref<1x128xf32, #tpu.memory_space<vmem>>, vector<1x128xf32>
    %12 = vector.broadcast %11 : vector<1x128xf32> to vector<8x128xf32>
    %13 = arith.addf %10, %12 : vector<8x128xf32>
    %cst_11 = arith.constant 0.000000e+00 : f32
    %14 = vector.broadcast %cst_11 : f32 to vector<8x128xf32>
    %15 = arith.maximumf %13, %14 : vector<8x128xf32>
    %16 = arith.truncf %15 : vector<8x128xf32> to vector<8x128xbf16>
    %c0_12 = arith.constant 0 : index
    %c0_13 = arith.constant 0 : index
    %17 = vector.load %arg6[%c0_12, %c0_13] : memref<128x128xbf16, #tpu.memory_space<vmem>>, vector<128x128xbf16>
    %cst_14 = arith.constant dense<0.000000e+00> : vector<8x128xf32>
    %18 = tpu.matmul %16, %17, %cst_14 {dimension_numbers = #tpu.dot_dimension_numbers<[1], [0], [0], [1], [0, 0, 1, 1], [], []>} : vector<8x128xbf16>, vector<128x128xbf16>, vector<8x128xf32> -> vector<8x128xf32>
    %c0_15 = arith.constant 0 : index
    %c0_16 = arith.constant 0 : index
    %19 = vector.load %arg7[%c0_15, %c0_16] : memref<1x128xf32, #tpu.memory_space<vmem>>, vector<1x128xf32>
    %20 = vector.broadcast %19 : vector<1x128xf32> to vector<8x128xf32>
    %21 = arith.addf %18, %20 : vector<8x128xf32>
    %cst_17 = arith.constant 0.000000e+00 : f32
    %22 = vector.broadcast %cst_17 : f32 to vector<8x128xf32>
    %23 = arith.maximumf %21, %22 : vector<8x128xf32>
    %24 = arith.truncf %23 : vector<8x128xf32> to vector<8x128xbf16>
    %c0_18 = arith.constant 0 : index
    %c0_19 = arith.constant 0 : index
    %25 = vector.load %arg8[%c0_18, %c0_19] : memref<128x128xbf16, #tpu.memory_space<vmem>>, vector<128x128xbf16>
    %cst_20 = arith.constant dense<0.000000e+00> : vector<8x128xf32>
    %26 = tpu.matmul %24, %25, %cst_20 {dimension_numbers = #tpu.dot_dimension_numbers<[1], [0], [0], [1], [0, 0, 1, 1], [], []>} : vector<8x128xbf16>, vector<128x128xbf16>, vector<8x128xf32> -> vector<8x128xf32>
    %c0_21 = arith.constant 0 : index
    %c0_22 = arith.constant 0 : index
    %27 = vector.load %arg9[%c0_21, %c0_22] : memref<1x128xf32, #tpu.memory_space<vmem>>, vector<1x128xf32>
    %28 = vector.broadcast %27 : vector<1x128xf32> to vector<8x128xf32>
    %29 = arith.addf %26, %28 : vector<8x128xf32>
    %cst_23 = arith.constant 0.000000e+00 : f32
    %30 = vector.broadcast %cst_23 : f32 to vector<8x128xf32>
    %31 = arith.maximumf %29, %30 : vector<8x128xf32>
    %32 = arith.truncf %31 : vector<8x128xf32> to vector<8x128xbf16>
    %c0_24 = arith.constant 0 : index
    %c0_25 = arith.constant 0 : index
    %33 = vector.load %arg10[%c0_24, %c0_25] : memref<128x128xbf16, #tpu.memory_space<vmem>>, vector<128x128xbf16>
    %cst_26 = arith.constant dense<0.000000e+00> : vector<8x128xf32>
    %34 = tpu.matmul %32, %33, %cst_26 {dimension_numbers = #tpu.dot_dimension_numbers<[1], [0], [0], [1], [0, 0, 1, 1], [], []>} : vector<8x128xbf16>, vector<128x128xbf16>, vector<8x128xf32> -> vector<8x128xf32>
    %c0_27 = arith.constant 0 : index
    %c0_28 = arith.constant 0 : index
    %35 = vector.load %arg11[%c0_27, %c0_28] : memref<1x128xf32, #tpu.memory_space<vmem>>, vector<1x128xf32>
    %36 = vector.broadcast %35 : vector<1x128xf32> to vector<8x128xf32>
    %37 = arith.addf %34, %36 : vector<8x128xf32>
    %c0_29 = arith.constant 0 : index
    %c0_30 = arith.constant 0 : index
    %38 = vector.load %arg12[%c0_29, %c0_30] : memref<8x128xf32, #tpu.memory_space<vmem>>, vector<8x128xf32>
    tpu.vector_store %arg12[%c0_29, %c0_30], %37 {strides = array<i32>} : memref<8x128xf32, #tpu.memory_space<vmem>>, vector<8x128xf32>,
    return
  }
  func.func @transform_0(%arg0: i32) -> (i32, i32) {
    %c0_i32 = arith.constant 0 : i32
    %c0_i32_0 = arith.constant 0 : i32
    return %arg0, %c0_i32 : i32, i32
  }
  func.func @transform_1(%arg0: i32) -> (i32, i32) {
    %c0_i32 = arith.constant 0 : i32
    %c0_i32_0 = arith.constant 0 : i32
    %c0_i32_1 = arith.constant 0 : i32
    return %c0_i32, %c0_i32_0 : i32, i32
  }
  func.func @transform_2(%arg0: i32) -> (i32, i32) {
    %c0_i32 = arith.constant 0 : i32
    %c0_i32_0 = arith.constant 0 : i32
    %c0_i32_1 = arith.constant 0 : i32
    return %c0_i32, %c0_i32_0 : i32, i32
  }
  func.func @transform_3(%arg0: i32) -> (i32, i32) {
    %c0_i32 = arith.constant 0 : i32
    %c0_i32_0 = arith.constant 0 : i32
    %c0_i32_1 = arith.constant 0 : i32
    return %c0_i32, %c0_i32_0 : i32, i32
  }
  func.func @transform_4(%arg0: i32) -> (i32, i32) {
    %c0_i32 = arith.constant 0 : i32
    %c0_i32_0 = arith.constant 0 : i32
    %c0_i32_1 = arith.constant 0 : i32
    return %c0_i32, %c0_i32_0 : i32, i32
  }
  func.func @transform_5(%arg0: i32) -> (i32, i32) {
    %c0_i32 = arith.constant 0 : i32
    %c0_i32_0 = arith.constant 0 : i32
    %c0_i32_1 = arith.constant 0 : i32
    return %c0_i32, %c0_i32_0 : i32, i32
  }
  func.func @transform_6(%arg0: i32) -> (i32, i32) {
    %c0_i32 = arith.constant 0 : i32
    %c0_i32_0 = arith.constant 0 : i32
    %c0_i32_1 = arith.constant 0 : i32
    return %c0_i32, %c0_i32_0 : i32, i32
  }
  func.func @transform_7(%arg0: i32) -> (i32, i32) {
    %c0_i32 = arith.constant 0 : i32
    %c0_i32_0 = arith.constant 0 : i32
    %c0_i32_1 = arith.constant 0 : i32
    return %c0_i32, %c0_i32_0 : i32, i32
  }
  func.func @transform_8(%arg0: i32) -> (i32, i32) {
    %c0_i32 = arith.constant 0 : i32
    %c0_i32_0 = arith.constant 0 : i32
    %c0_i32_1 = arith.constant 0 : i32
    return %c0_i32, %c0_i32_0 : i32, i32
  }
  func.func @transform_9(%arg0: i32) -> (i32, i32) {
    %c0_i32 = arith.constant 0 : i32
    %c0_i32_0 = arith.constant 0 : i32
    %c0_i32_1 = arith.constant 0 : i32
    return %c0_i32, %c0_i32_0 : i32, i32
  }
  func.func @transform_10(%arg0: i32) -> (i32, i32) {
    %c0_i32 = arith.constant 0 : i32
    %c0_i32_0 = arith.constant 0 : i32
    %c0_i32_1 = arith.constant 0 : i32
    return %c0_i32, %c0_i32_0 : i32, i32
  }
  func.func @transform_11(%arg0: i32) -> (i32, i32) {
    %c0_i32 = arith.constant 0 : i32
    %c0_i32_0 = arith.constant 0 : i32
    return %arg0, %c0_i32 : i32, i32
  }
}

</mosaic_0001>

<llo_original>
// kernel: tpu_custom_call.1
$region0: #{tpu_custom_call.1}
  #allocation0 [shape = 'u32[]', space=smem, size = 0x4, offset = 0x4, fixed_abs, tag = 'smem constant byte address 0x4 - core index']
  #allocation1 [shape = 'u32[144,128]{1,0:T(1,128)}', space=vmem, size = 0x12000, scoped, tag = 'internal scratch']
  %s0 = inlined_call_operand.hbm [shape: bf16[8,128], index: 0, kind: input, shape index: {}]
  %s1 = inlined_call_operand.hbm [shape: bf16[128,128], index: 1, kind: input, shape index: {}]
  %s2 = inlined_call_operand.vmem [shape: f32[1,128], index: 2, kind: input, shape index: {}]
  %s3 = inlined_call_operand.hbm [shape: bf16[128,128], index: 3, kind: input, shape index: {}]
  %s4 = inlined_call_operand.vmem [shape: f32[1,128], index: 4, kind: input, shape index: {}]
  %s5 = inlined_call_operand.hbm [shape: bf16[128,128], index: 5, kind: input, shape index: {}]
  %s6 = inlined_call_operand.vmem [shape: f32[1,128], index: 6, kind: input, shape index: {}]
  %s7 = inlined_call_operand.hbm [shape: bf16[128,128], index: 7, kind: input, shape index: {}]
  %s8 = inlined_call_operand.vmem [shape: f32[1,128], index: 8, kind: input, shape index: {}]
  %s9 = inlined_call_operand.hbm [shape: bf16[128,128], index: 9, kind: input, shape index: {}]
  %s10 = inlined_call_operand.vmem [shape: f32[1,128], index: 10, kind: input, shape index: {}]
  %s11 = inlined_call_operand.hbm [shape: f32[8,128], index: 11, kind: output, shape index: {}]
  %s12 = sld [smem:[#allocation0]]
  $region78: #{tpu_custom_call.1} parent=0
    _
  %s14 = ssub.s32 1, %s12
  %s15 = scalar_select 0, %s14, %s12
  $region1: #{tpu_custom_call.1} parent=0
    #allocation2 [shape = 'u8[2048]{0}', space=vmem, size = 0x800, scoped, tag = 'input window, operand 0, single buffered']
    #allocation3 [shape = 's32[1]{0}', space=sflag, size = 0x4, scoped, tag = 'scoped memory for tpu_custom_call.1']
    #allocation4 [shape = 's32[1]{0}', space=sflag, size = 0x4, scoped, tag = 'scoped memory for tpu_custom_call.1']
    #allocation5 [shape = 'u8[32768]{0}', space=vmem, size = 0x8000, scoped, tag = 'input window, operand 1, single buffered']
    #allocation6 [shape = 's32[1]{0}', space=sflag, size = 0x4, scoped, tag = 'scoped memory for tpu_custom_call.1']
    #allocation7 [shape = 'u8[32768]{0}', space=vmem, size = 0x8000, scoped, tag = 'input window, operand 3, single buffered']
    #allocation8 [shape = 'u8[32768]{0}', space=vmem, size = 0x8000, scoped, tag = 'input window, operand 5, single buffered']
    #allocation9 [shape = 's32[1]{0}', space=sflag, size = 0x4, scoped, tag = 'scoped memory for tpu_custom_call.1']
    #allocation10 [shape = 'u8[32768]{0}', space=vmem, size = 0x8000, scoped, tag = 'input window, operand 7, single buffered']
    #allocation11 [shape = 'u8[32768]{0}', space=vmem, size = 0x8000, scoped, tag = 'input window, operand 9, single buffered']
    #allocation12 [shape = 's32[1]{0}', space=sflag, size = 0x4, scoped, tag = 'scoped memory for tpu_custom_call.1']
    #allocation13 [shape = 'u8[4096]{0}', space=vmem, size = 0x1000, scoped, tag = 'output window, operand 0, single buffered']
    %16 = vsyncpa [#allocation3], 0
    %17 = vsyncpa [#allocation6], 0
    %18 = vsyncpa [#allocation9], 0
    %19 = vsyncpa [#allocation12], 0
    %20 = vsyncpa [#allocation4], 0
    // Predicated region
    $region2: #{tpu_custom_call.1} parent=1 // pred_check
      _
    $region3: #{tpu_custom_call.1} parent=1 // pred_check_branch
      %22 = sbr.rel (0) target = $region5
    $region4: #{tpu_custom_call.1} parent=1 // pred_region
      %s24 = ssub.s32 64, 64
      %25 = vsyncadd [#allocation3], %s24
      %s27 = sshll.u32 [#allocation2], 4
      %s28 = int_to_ptr.vmem [resolvable:$true] %s27
      %30 = dma.hbm_to_vmem [thread:$0]  %s0, 64, %s28, [#allocation3]
    $region5: #{tpu_custom_call.1} parent=1 // pred_fallthru
      _
    // Predicated region
    $region6: #{tpu_custom_call.1} parent=1 // pred_check
      _
    $region7: #{tpu_custom_call.1} parent=1 // pred_check_branch
      %32 = sbr.rel (0) target = $region9
    $region8: #{tpu_custom_call.1} parent=1 // pred_region
      %s34 = ssub.s32 1024, 1024
      %35 = vsyncadd [#allocation6], %s34
      %s36 = sshll.u32 [#allocation5], 4
      %s37 = int_to_ptr.vmem [resolvable:$true] %s36
      %42 = dma.hbm_to_vmem [thread:$0]  %s1, 1024, %s37, [#allocation6], 64, 64, 4
    $region9: #{tpu_custom_call.1} parent=1 // pred_fallthru
      _
    // Predicated region
    $region10: #{tpu_custom_call.1} parent=1 // pred_check
      _
    $region11: #{tpu_custom_call.1} parent=1 // pred_check_branch
      %44 = sbr.rel (0) target = $region13
    $region12: #{tpu_custom_call.1} parent=1 // pred_region
      _
    $region13: #{tpu_custom_call.1} parent=1 // pred_fallthru
      _
    // Predicated region
    $region14: #{tpu_custom_call.1} parent=1 // pred_check
      _
    $region15: #{tpu_custom_call.1} parent=1 // pred_check_branch
      %46 = sbr.rel (0) target = $region17
    $region16: #{tpu_custom_call.1} parent=1 // pred_region
      %s48 = ssub.s32 1024, 1024
      %49 = vsyncadd [#allocation6], %s48
      %s50 = sshll.u32 [#allocation7], 4
      %s51 = int_to_ptr.vmem [resolvable:$true] %s50
      %56 = dma.hbm_to_vmem [thread:$0]  %s3, 1024, %s51, [#allocation6], 64, 64, 4
    $region17: #{tpu_custom_call.1} parent=1 // pred_fallthru
      _
    // Predicated region
    $region18: #{tpu_custom_call.1} parent=1 // pred_check
      _
    $region19: #{tpu_custom_call.1} parent=1 // pred_check_branch
      %58 = sbr.rel (0) target = $region21
    $region20: #{tpu_custom_call.1} parent=1 // pred_region
      _
    $region21: #{tpu_custom_call.1} parent=1 // pred_fallthru
      _
    // Predicated region
    $region22: #{tpu_custom_call.1} parent=1 // pred_check
      _
    $region23: #{tpu_custom_call.1} parent=1 // pred_check_branch
      %60 = sbr.rel (0) target = $region25
    $region24: #{tpu_custom_call.1} parent=1 // pred_region
      %s62 = ssub.s32 1024, 1024
      %63 = vsyncadd [#allocation9], %s62
      %s64 = sshll.u32 [#allocation8], 4
      %s65 = int_to_ptr.vmem [resolvable:$true] %s64
      %70 = dma.hbm_to_vmem [thread:$0]  %s5, 1024, %s65, [#allocation9], 64, 64, 4
    $region25: #{tpu_custom_call.1} parent=1 // pred_fallthru
      _
    // Predicated region
    $region26: #{tpu_custom_call.1} parent=1 // pred_check
      _
    $region27: #{tpu_custom_call.1} parent=1 // pred_check_branch
      %72 = sbr.rel (0) target = $region29
    $region28: #{tpu_custom_call.1} parent=1 // pred_region
      _
    $region29: #{tpu_custom_call.1} parent=1 // pred_fallthru
      _
    // Predicated region
    $region30: #{tpu_custom_call.1} parent=1 // pred_check
      _
    $region31: #{tpu_custom_call.1} parent=1 // pred_check_branch
      %74 = sbr.rel (0) target = $region33
    $region32: #{tpu_custom_call.1} parent=1 // pred_region
      %s76 = ssub.s32 1024, 1024
      %77 = vsyncadd [#allocation9], %s76
      %s78 = sshll.u32 [#allocation10], 4
      %s79 = int_to_ptr.vmem [resolvable:$true] %s78
      %84 = dma.hbm_to_vmem [thread:$0]  %s7, 1024, %s79, [#allocation9], 64, 64, 4
    $region33: #{tpu_custom_call.1} parent=1 // pred_fallthru
      _
    // Predicated region
    $region34: #{tpu_custom_call.1} parent=1 // pred_check
      _
    $region35: #{tpu_custom_call.1} parent=1 // pred_check_branch
      %86 = sbr.rel (0) target = $region37
    $region36: #{tpu_custom_call.1} parent=1 // pred_region
      _
    $region37: #{tpu_custom_call.1} parent=1 // pred_fallthru
      _
    // Predicated region
    $region38: #{tpu_custom_call.1} parent=1 // pred_check
      _
    $region39: #{tpu_custom_call.1} parent=1 // pred_check_branch
      %88 = sbr.rel (0) target = $region41
    $region40: #{tpu_custom_call.1} parent=1 // pred_region
      %s90 = ssub.s32 1024, 1024
      %91 = vsyncadd [#allocation12], %s90
      %s92 = sshll.u32 [#allocation11], 4
      %s93 = int_to_ptr.vmem [resolvable:$true] %s92
      %98 = dma.hbm_to_vmem [thread:$0]  %s9, 1024, %s93, [#allocation12], 64, 64, 4
    $region41: #{tpu_custom_call.1} parent=1 // pred_fallthru
      _
    // Predicated region
    $region42: #{tpu_custom_call.1} parent=1 // pred_check
      _
    $region43: #{tpu_custom_call.1} parent=1 // pred_check_branch
      %100 = sbr.rel (0) target = $region45
    $region44: #{tpu_custom_call.1} parent=1 // pred_region
      _
    $region45: #{tpu_custom_call.1} parent=1 // pred_fallthru
      _
    // Predicated region
    $region46: #{tpu_custom_call.1} parent=1 // pred_check
      _
    $region47: #{tpu_custom_call.1} parent=1 // pred_check_branch
      %102 = sbr.rel (0) target = $region49
    $region48: #{tpu_custom_call.1} parent=1 // pred_region
      %103 = dma.done [#allocation3], 64
    $region49: #{tpu_custom_call.1} parent=1 // pred_fallthru
      _
    // Predicated region
    $region50: #{tpu_custom_call.1} parent=1 // pred_check
      _
    $region51: #{tpu_custom_call.1} parent=1 // pred_check_branch
      %105 = sbr.rel (0) target = $region53
    $region52: #{tpu_custom_call.1} parent=1 // pred_region
      %106 = dma.done [#allocation6], 1024
    $region53: #{tpu_custom_call.1} parent=1 // pred_fallthru
      _
    // Predicated region
    $region54: #{tpu_custom_call.1} parent=1 // pred_check
      _
    $region55: #{tpu_custom_call.1} parent=1 // pred_check_branch
      %108 = sbr.rel (0) target = $region57
    $region56: #{tpu_custom_call.1} parent=1 // pred_region
      %109 = dma.done [#allocation6], 1024
    $region57: #{tpu_custom_call.1} parent=1 // pred_fallthru
      _
    // Predicated region
    $region58: #{tpu_custom_call.1} parent=1 // pred_check
      _
    $region59: #{tpu_custom_call.1} parent=1 // pred_check_branch
      %111 = sbr.rel (0) target = $region61
    $region60: #{tpu_custom_call.1} parent=1 // pred_region
      %112 = dma.done [#allocation9], 1024
    $region61: #{tpu_custom_call.1} parent=1 // pred_fallthru
      _
    // Predicated region
    $region62: #{tpu_custom_call.1} parent=1 // pred_check
      _
    $region63: #{tpu_custom_call.1} parent=1 // pred_check_branch
      %114 = sbr.rel (0) target = $region65
    $region64: #{tpu_custom_call.1} parent=1 // pred_region
      %115 = dma.done [#allocation9], 1024
    $region65: #{tpu_custom_call.1} parent=1 // pred_fallthru
      _
    // Predicated region
    $region66: #{tpu_custom_call.1} parent=1 // pred_check
      _
    $region67: #{tpu_custom_call.1} parent=1 // pred_check_branch
      %117 = sbr.rel (0) target = $region69
    $region68: #{tpu_custom_call.1} parent=1 // pred_region
      %118 = dma.done [#allocation12], 1024
    $region69: #{tpu_custom_call.1} parent=1 // pred_fallthru
      _
    %v120 = vld [vmem:[#allocation2] sm:$0xf]
    %v121 = vld [vmem:[#allocation5] sm:$0xf]
    %v122 = vld [vmem:[#allocation5 + $0x4] sm:$0xf]
    %v123 = vld [vmem:[#allocation5 + $0x8] sm:$0xf]
    %v124 = vld [vmem:[#allocation5 + $0xc] sm:$0xf]
    %v125 = vld [vmem:[#allocation5 + $0x10] sm:$0xf]
    %v126 = vld [vmem:[#allocation5 + $0x14] sm:$0xf]
    %v127 = vld [vmem:[#allocation5 + $0x18] sm:$0xf]
    %v128 = vld [vmem:[#allocation5 + $0x1c] sm:$0xf]
    %v129 = vld [vmem:[#allocation5 + $0x20] sm:$0xf]
    %v130 = vld [vmem:[#allocation5 + $0x24] sm:$0xf]
    %v131 = vld [vmem:[#allocation5 + $0x28] sm:$0xf]
    %v132 = vld [vmem:[#allocation5 + $0x2c] sm:$0xf]
    %v133 = vld [vmem:[#allocation5 + $0x30] sm:$0xf]
    %v134 = vld [vmem:[#allocation5 + $0x34] sm:$0xf]
    %v135 = vld [vmem:[#allocation5 + $0x38] sm:$0xf]
    %v136 = vld [vmem:[#allocation5 + $0x3c] sm:$0xf]
    %v137 = vld [vmem:[%s2] sm:$0x1]
    %v139 = vlaneseq
    %v140 = vshrl.u32 %v139, 7
    %v141 = vsub.s32 0, %v140
    %v142 = vrot.slane %v137, %v141
    %v160 = vunpack.c.l.b16 %v121
    %v161 = vunpack.c.l.b16 %v122
    %v162 = vunpack.c.l.b16 %v123
    %v163 = vunpack.c.l.b16 %v124
    %v164 = vunpack.c.l.b16 %v125
    %v165 = vunpack.c.l.b16 %v126
    %v166 = vunpack.c.l.b16 %v127
    %v167 = vunpack.c.l.b16 %v128
    %v168 = vunpack.c.l.b16 %v129
    %v169 = vunpack.c.l.b16 %v130
    %v170 = vunpack.c.l.b16 %v131
    %v171 = vunpack.c.l.b16 %v132
    %v172 = vunpack.c.l.b16 %v133
    %v173 = vunpack.c.l.b16 %v134
    %v174 = vunpack.c.l.b16 %v135
    %v175 = vunpack.c.l.b16 %v136
    %v176 = vpack.c.b16 %v161, %v160
    %v177 = vpack.c.b16 %v163, %v162
    %v178 = vpack.c.b16 %v165, %v164
    %v179 = vpack.c.b16 %v167, %v166
    %v180 = vpack.c.b16 %v169, %v168
    %v181 = vpack.c.b16 %v171, %v170
    %v182 = vpack.c.b16 %v173, %v172
    %v183 = vpack.c.b16 %v175, %v174
    %192 = vmatprep.subr.bf16.mxu0 0
    %193 = vmatpush1.bf16.msra.mxu0 %v176
    %194 = vmatprep.subr.bf16.mxu0 0
    %195 = vmatpush1.bf16.msra.mxu0 %v177
    %196 = vmatprep.subr.bf16.mxu0 0
    %197 = vmatpush1.bf16.msra.mxu0 %v178
    %198 = vmatprep.subr.bf16.mxu0 0
    %199 = vmatpush1.bf16.msra.mxu0 %v179
    %200 = vmatprep.subr.bf16.mxu0 0
    %201 = vmatpush1.bf16.msra.mxu0 %v180
    %202 = vmatprep.subr.bf16.mxu0 0
    %203 = vmatpush1.bf16.msra.mxu0 %v181
    %204 = vmatprep.subr.bf16.mxu0 0
    %205 = vmatpush1.bf16.msra.mxu0 %v182
    %206 = vmatprep.subr.bf16.mxu0 0
    %207 = vmatpush1.bf16.msra.mxu0 %v183
    %208 = vmatprep.subr.bf16.mxu0 0
    %209 = vmatpush1.bf16.msra.mxu0 0
    %210 = vmatprep.subr.bf16.mxu0 0
    %211 = vmatpush1.bf16.msra.mxu0 0
    %212 = vmatprep.subr.bf16.mxu0 0
    %213 = vmatpush1.bf16.msra.mxu0 0
    %214 = vmatprep.subr.bf16.mxu0 0
    %215 = vmatpush1.bf16.msra.mxu0 0
    %216 = vmatprep.subr.bf16.mxu0 0
    %217 = vmatpush1.bf16.msra.mxu0 0
    %218 = vmatprep.subr.bf16.mxu0 0
    %219 = vmatpush1.bf16.msra.mxu0 0
    %220 = vmatprep.subr.bf16.mxu0 0
    %221 = vmatpush1.bf16.msra.mxu0 0
    %222 = vmatprep.subr.bf16.mxu0 0
    %223 = vmatpush1.bf16.msra.mxu0 0
    %224 = vmatprep.mubr.bf16.mxu0 0
    %225 = vmatmul.mubr.bf16.gmra.mrb[0].mxu0 %v120
    %v226 = vpop.f32.mrb[0].mxu0
    %v227 = vadd.f32 %v142, %v226
    %v228 = vpop.f32.mrb[0].mxu0
    %v229 = vpop.f32.mrb[0].mxu0
    %v230 = vpop.f32.mrb[0].mxu0
    %231 = vdwg.mxu0
    %v232 = vmax.f32 %v227, 0.0
    %v233 = vpack.c.bf16 %v232, %v232
    %v234 = vld [vmem:[#allocation7] sm:$0xf]
    %v235 = vld [vmem:[#allocation7 + $0x4] sm:$0xf]
    %v236 = vld [vmem:[#allocation7 + $0x8] sm:$0xf]
    %v237 = vld [vmem:[#allocation7 + $0xc] sm:$0xf]
    %v238 = vld [vmem:[#allocation7 + $0x10] sm:$0xf]
    %v239 = vld [vmem:[#allocation7 + $0x14] sm:$0xf]
    %v240 = vld [vmem:[#allocation7 + $0x18] sm:$0xf]
    %v241 = vld [vmem:[#allocation7 + $0x1c] sm:$0xf]
    %v242 = vld [vmem:[#allocation7 + $0x20] sm:$0xf]
    %v243 = vld [vmem:[#allocation7 + $0x24] sm:$0xf]
    %v244 = vld [vmem:[#allocation7 + $0x28] sm:$0xf]
    %v245 = vld [vmem:[#allocation7 + $0x2c] sm:$0xf]
    %v246 = vld [vmem:[#allocation7 + $0x30] sm:$0xf]
    %v247 = vld [vmem:[#allocation7 + $0x34] sm:$0xf]
    %v248 = vld [vmem:[#allocation7 + $0x38] sm:$0xf]
    %v249 = vld [vmem:[#allocation7 + $0x3c] sm:$0xf]
    %v250 = vld [vmem:[%s4] sm:$0x1]
    %v252 = vlaneseq
    %v253 = vshrl.u32 %v252, 7
    %v254 = vsub.s32 0, %v253
    %v255 = vrot.slane %v250, %v254
    %v273 = vunpack.c.l.b16 %v234
    %v274 = vunpack.c.l.b16 %v235
    %v275 = vunpack.c.l.b16 %v236
    %v276 = vunpack.c.l.b16 %v237
    %v277 = vunpack.c.l.b16 %v238
    %v278 = vunpack.c.l.b16 %v239
    %v279 = vunpack.c.l.b16 %v240
    %v280 = vunpack.c.l.b16 %v241
    %v281 = vunpack.c.l.b16 %v242
    %v282 = vunpack.c.l.b16 %v243
    %v283 = vunpack.c.l.b16 %v244
    %v284 = vunpack.c.l.b16 %v245
    %v285 = vunpack.c.l.b16 %v246
    %v286 = vunpack.c.l.b16 %v247
    %v287 = vunpack.c.l.b16 %v248
    %v288 = vunpack.c.l.b16 %v249
    %v289 = vpack.c.b16 %v274, %v273
    %v290 = vpack.c.b16 %v276, %v275
    %v291 = vpack.c.b16 %v278, %v277
    %v292 = vpack.c.b16 %v280, %v279
    %v293 = vpack.c.b16 %v282, %v281
    %v294 = vpack.c.b16 %v284, %v283
    %v295 = vpack.c.b16 %v286, %v285
    %v296 = vpack.c.b16 %v288, %v287
    %305 = vmatprep.subr.bf16.mxu0 0
    %306 = vmatpush1.bf16.msra.mxu0 %v289
    %307 = vmatprep.subr.bf16.mxu0 0
    %308 = vmatpush1.bf16.msra.mxu0 %v290
    %309 = vmatprep.subr.bf16.mxu0 0
    %310 = vmatpush1.bf16.msra.mxu0 %v291
    %311 = vmatprep.subr.bf16.mxu0 0
    %312 = vmatpush1.bf16.msra.mxu0 %v292
    %313 = vmatprep.subr.bf16.mxu0 0
    %314 = vmatpush1.bf16.msra.mxu0 %v293
    %315 = vmatprep.subr.bf16.mxu0 0
    %316 = vmatpush1.bf16.msra.mxu0 %v294
    %317 = vmatprep.subr.bf16.mxu0 0
    %318 = vmatpush1.bf16.msra.mxu0 %v295
    %319 = vmatprep.subr.bf16.mxu0 0
    %320 = vmatpush1.bf16.msra.mxu0 %v296
    %321 = vmatprep.subr.bf16.mxu0 0
    %322 = vmatpush1.bf16.msra.mxu0 0
    %323 = vmatprep.subr.bf16.mxu0 0
    %324 = vmatpush1.bf16.msra.mxu0 0
    %325 = vmatprep.subr.bf16.mxu0 0
    %326 = vmatpush1.bf16.msra.mxu0 0
    %327 = vmatprep.subr.bf16.mxu0 0
    %328 = vmatpush1.bf16.msra.mxu0 0
    %329 = vmatprep.subr.bf16.mxu0 0
    %330 = vmatpush1.bf16.msra.mxu0 0
    %331 = vmatprep.subr.bf16.mxu0 0
    %332 = vmatpush1.bf16.msra.mxu0 0
    %333 = vmatprep.subr.bf16.mxu0 0
    %334 = vmatpush1.bf16.msra.mxu0 0
    %335 = vmatprep.subr.bf16.mxu0 0
    %336 = vmatpush1.bf16.msra.mxu0 0
    %337 = vmatprep.mubr.bf16.mxu0 0
    %338 = vmatmul.mubr.bf16.gmra.mrb[0].mxu0 %v233
    %v339 = vpop.f32.mrb[0].mxu0
    %v340 = vadd.f32 %v255, %v339
    %v341 = vpop.f32.mrb[0].mxu0
    %v342 = vpop.f32.mrb[0].mxu0
    %v343 = vpop.f32.mrb[0].mxu0
    %344 = vdwg.mxu0
    %v345 = vmax.f32 %v340, 0.0
    %v346 = vpack.c.bf16 %v345, %v345
    %v347 = vld [vmem:[#allocation8] sm:$0xf]
    %v348 = vld [vmem:[#allocation8 + $0x4] sm:$0xf]
    %v349 = vld [vmem:[#allocation8 + $0x8] sm:$0xf]
    %v350 = vld [vmem:[#allocation8 + $0xc] sm:$0xf]
    %v351 = vld [vmem:[#allocation8 + $0x10] sm:$0xf]
    %v352 = vld [vmem:[#allocation8 + $0x14] sm:$0xf]
    %v353 = vld [vmem:[#allocation8 + $0x18] sm:$0xf]
    %v354 = vld [vmem:[#allocation8 + $0x1c] sm:$0xf]
    %v355 = vld [vmem:[#allocation8 + $0x20] sm:$0xf]
    %v356 = vld [vmem:[#allocation8 + $0x24] sm:$0xf]
    %v357 = vld [vmem:[#allocation8 + $0x28] sm:$0xf]
    %v358 = vld [vmem:[#allocation8 + $0x2c] sm:$0xf]
    %v359 = vld [vmem:[#allocation8 + $0x30] sm:$0xf]
    %v360 = vld [vmem:[#allocation8 + $0x34] sm:$0xf]
    %v361 = vld [vmem:[#allocation8 + $0x38] sm:$0xf]
    %v362 = vld [vmem:[#allocation8 + $0x3c] sm:$0xf]
    %v363 = vld [vmem:[%s6] sm:$0x1]
    %v365 = vlaneseq
    %v366 = vshrl.u32 %v365, 7
    %v367 = vsub.s32 0, %v366
    %v368 = vrot.slane %v363, %v367
    %v386 = vunpack.c.l.b16 %v347
    %v387 = vunpack.c.l.b16 %v348
    %v388 = vunpack.c.l.b16 %v349
    %v389 = vunpack.c.l.b16 %v350
    %v390 = vunpack.c.l.b16 %v351
    %v391 = vunpack.c.l.b16 %v352
    %v392 = vunpack.c.l.b16 %v353
    %v393 = vunpack.c.l.b16 %v354
    %v394 = vunpack.c.l.b16 %v355
    %v395 = vunpack.c.l.b16 %v356
    %v396 = vunpack.c.l.b16 %v357
    %v397 = vunpack.c.l.b16 %v358
    %v398 = vunpack.c.l.b16 %v359
    %v399 = vunpack.c.l.b16 %v360
    %v400 = vunpack.c.l.b16 %v361
    %v401 = vunpack.c.l.b16 %v362
    %v402 = vpack.c.b16 %v387, %v386
    %v403 = vpack.c.b16 %v389, %v388
    %v404 = vpack.c.b16 %v391, %v390
    %v405 = vpack.c.b16 %v393, %v392
    %v406 = vpack.c.b16 %v395, %v394
    %v407 = vpack.c.b16 %v397, %v396
    %v408 = vpack.c.b16 %v399, %v398
    %v409 = vpack.c.b16 %v401, %v400
    %418 = vmatprep.subr.bf16.mxu0 0
    %419 = vmatpush1.bf16.msra.mxu0 %v402
    %420 = vmatprep.subr.bf16.mxu0 0
    %421 = vmatpush1.bf16.msra.mxu0 %v403
    %422 = vmatprep.subr.bf16.mxu0 0
    %423 = vmatpush1.bf16.msra.mxu0 %v404
    %424 = vmatprep.subr.bf16.mxu0 0
    %425 = vmatpush1.bf16.msra.mxu0 %v405
    %426 = vmatprep.subr.bf16.mxu0 0
    %427 = vmatpush1.bf16.msra.mxu0 %v406
    %428 = vmatprep.subr.bf16.mxu0 0
    %429 = vmatpush1.bf16.msra.mxu0 %v407
    %430 = vmatprep.subr.bf16.mxu0 0
    %431 = vmatpush1.bf16.msra.mxu0 %v408
    %432 = vmatprep.subr.bf16.mxu0 0
    %433 = vmatpush1.bf16.msra.mxu0 %v409
    %434 = vmatprep.subr.bf16.mxu0 0
    %435 = vmatpush1.bf16.msra.mxu0 0
    %436 = vmatprep.subr.bf16.mxu0 0
    %437 = vmatpush1.bf16.msra.mxu0 0
    %438 = vmatprep.subr.bf16.mxu0 0
    %439 = vmatpush1.bf16.msra.mxu0 0
    %440 = vmatprep.subr.bf16.mxu0 0
    %441 = vmatpush1.bf16.msra.mxu0 0
    %442 = vmatprep.subr.bf16.mxu0 0
    %443 = vmatpush1.bf16.msra.mxu0 0
    %444 = vmatprep.subr.bf16.mxu0 0
    %445 = vmatpush1.bf16.msra.mxu0 0
    %446 = vmatprep.subr.bf16.mxu0 0
    %447 = vmatpush1.bf16.msra.mxu0 0
    %448 = vmatprep.subr.bf16.mxu0 0
    %449 = vmatpush1.bf16.msra.mxu0 0
    %450 = vmatprep.mubr.bf16.mxu0 0
    %451 = vmatmul.mubr.bf16.gmra.mrb[0].mxu0 %v346
    %v452 = vpop.f32.mrb[0].mxu0
    %v453 = vadd.f32 %v368, %v452
    %v454 = vpop.f32.mrb[0].mxu0
    %v455 = vpop.f32.mrb[0].mxu0
    %v456 = vpop.f32.mrb[0].mxu0
    %457 = vdwg.mxu0
    %v458 = vmax.f32 %v453, 0.0
    %v459 = vpack.c.bf16 %v458, %v458
    %v460 = vld [vmem:[#allocation10] sm:$0xf]
    %v461 = vld [vmem:[#allocation10 + $0x4] sm:$0xf]
    %v462 = vld [vmem:[#allocation10 + $0x8] sm:$0xf]
    %v463 = vld [vmem:[#allocation10 + $0xc] sm:$0xf]
    %v464 = vld [vmem:[#allocation10 + $0x10] sm:$0xf]
    %v465 = vld [vmem:[#allocation10 + $0x14] sm:$0xf]
    %v466 = vld [vmem:[#allocation10 + $0x18] sm:$0xf]
    %v467 = vld [vmem:[#allocation10 + $0x1c] sm:$0xf]
    %v468 = vld [vmem:[#allocation10 + $0x20] sm:$0xf]
    %v469 = vld [vmem:[#allocation10 + $0x24] sm:$0xf]
    %v470 = vld [vmem:[#allocation10 + $0x28] sm:$0xf]
    %v471 = vld [vmem:[#allocation10 + $0x2c] sm:$0xf]
    %v472 = vld [vmem:[#allocation10 + $0x30] sm:$0xf]
    %v473 = vld [vmem:[#allocation10 + $0x34] sm:$0xf]
    %v474 = vld [vmem:[#allocation10 + $0x38] sm:$0xf]
    %v475 = vld [vmem:[#allocation10 + $0x3c] sm:$0xf]
    %v476 = vld [vmem:[%s8] sm:$0x1]
    %v478 = vlaneseq
    %v479 = vshrl.u32 %v478, 7
    %v480 = vsub.s32 0, %v479
    %v481 = vrot.slane %v476, %v480
    %v499 = vunpack.c.l.b16 %v460
    %v500 = vunpack.c.l.b16 %v461
    %v501 = vunpack.c.l.b16 %v462
    %v502 = vunpack.c.l.b16 %v463
    %v503 = vunpack.c.l.b16 %v464
    %v504 = vunpack.c.l.b16 %v465
    %v505 = vunpack.c.l.b16 %v466
    %v506 = vunpack.c.l.b16 %v467
    %v507 = vunpack.c.l.b16 %v468
    %v508 = vunpack.c.l.b16 %v469
    %v509 = vunpack.c.l.b16 %v470
    %v510 = vunpack.c.l.b16 %v471
    %v511 = vunpack.c.l.b16 %v472
    %v512 = vunpack.c.l.b16 %v473
    %v513 = vunpack.c.l.b16 %v474
    %v514 = vunpack.c.l.b16 %v475
    %v515 = vpack.c.b16 %v500, %v499
    %v516 = vpack.c.b16 %v502, %v501
    %v517 = vpack.c.b16 %v504, %v503
    %v518 = vpack.c.b16 %v506, %v505
    %v519 = vpack.c.b16 %v508, %v507
    %v520 = vpack.c.b16 %v510, %v509
    %v521 = vpack.c.b16 %v512, %v511
    %v522 = vpack.c.b16 %v514, %v513
    %531 = vmatprep.subr.bf16.mxu0 0
    %532 = vmatpush1.bf16.msra.mxu0 %v515
    %533 = vmatprep.subr.bf16.mxu0 0
    %534 = vmatpush1.bf16.msra.mxu0 %v516
    %535 = vmatprep.subr.bf16.mxu0 0
    %536 = vmatpush1.bf16.msra.mxu0 %v517
    %537 = vmatprep.subr.bf16.mxu0 0
    %538 = vmatpush1.bf16.msra.mxu0 %v518
    %539 = vmatprep.subr.bf16.mxu0 0
    %540 = vmatpush1.bf16.msra.mxu0 %v519
    %541 = vmatprep.subr.bf16.mxu0 0
    %542 = vmatpush1.bf16.msra.mxu0 %v520
    %543 = vmatprep.subr.bf16.mxu0 0
    %544 = vmatpush1.bf16.msra.mxu0 %v521
    %545 = vmatprep.subr.bf16.mxu0 0
    %546 = vmatpush1.bf16.msra.mxu0 %v522
    %547 = vmatprep.subr.bf16.mxu0 0
    %548 = vmatpush1.bf16.msra.mxu0 0
    %549 = vmatprep.subr.bf16.mxu0 0
    %550 = vmatpush1.bf16.msra.mxu0 0
    %551 = vmatprep.subr.bf16.mxu0 0
    %552 = vmatpush1.bf16.msra.mxu0 0
    %553 = vmatprep.subr.bf16.mxu0 0
    %554 = vmatpush1.bf16.msra.mxu0 0
    %555 = vmatprep.subr.bf16.mxu0 0
    %556 = vmatpush1.bf16.msra.mxu0 0
    %557 = vmatprep.subr.bf16.mxu0 0
    %558 = vmatpush1.bf16.msra.mxu0 0
    %559 = vmatprep.subr.bf16.mxu0 0
    %560 = vmatpush1.bf16.msra.mxu0 0
    %561 = vmatprep.subr.bf16.mxu0 0
    %562 = vmatpush1.bf16.msra.mxu0 0
    %563 = vmatprep.mubr.bf16.mxu0 0
    %564 = vmatmul.mubr.bf16.gmra.mrb[0].mxu0 %v459
    %v565 = vpop.f32.mrb[0].mxu0
    %v566 = vadd.f32 %v481, %v565
    %v567 = vpop.f32.mrb[0].mxu0
    %v568 = vpop.f32.mrb[0].mxu0
    %v569 = vpop.f32.mrb[0].mxu0
    %570 = vdwg.mxu0
    %v571 = vmax.f32 %v566, 0.0
    %v572 = vpack.c.bf16 %v571, %v571
    %v573 = vld [vmem:[#allocation11] sm:$0xf]
    %v574 = vld [vmem:[#allocation11 + $0x4] sm:$0xf]
    %v575 = vld [vmem:[#allocation11 + $0x8] sm:$0xf]
    %v576 = vld [vmem:[#allocation11 + $0xc] sm:$0xf]
    %v577 = vld [vmem:[#allocation11 + $0x10] sm:$0xf]
    %v578 = vld [vmem:[#allocation11 + $0x14] sm:$0xf]
    %v579 = vld [vmem:[#allocation11 + $0x18] sm:$0xf]
    %v580 = vld [vmem:[#allocation11 + $0x1c] sm:$0xf]
    %v581 = vld [vmem:[#allocation11 + $0x20] sm:$0xf]
    %v582 = vld [vmem:[#allocation11 + $0x24] sm:$0xf]
    %v583 = vld [vmem:[#allocation11 + $0x28] sm:$0xf]
    %v584 = vld [vmem:[#allocation11 + $0x2c] sm:$0xf]
    %v585 = vld [vmem:[#allocation11 + $0x30] sm:$0xf]
    %v586 = vld [vmem:[#allocation11 + $0x34] sm:$0xf]
    %v587 = vld [vmem:[#allocation11 + $0x38] sm:$0xf]
    %v588 = vld [vmem:[#allocation11 + $0x3c] sm:$0xf]
    %v589 = vld [vmem:[%s10] sm:$0x1]
    %v591 = vlaneseq
    %v592 = vshrl.u32 %v591, 7
    %v593 = vsub.s32 0, %v592
    %v594 = vrot.slane %v589, %v593
    %v612 = vunpack.c.l.b16 %v573
    %v613 = vunpack.c.l.b16 %v574
    %v614 = vunpack.c.l.b16 %v575
    %v615 = vunpack.c.l.b16 %v576
    %v616 = vunpack.c.l.b16 %v577
    %v617 = vunpack.c.l.b16 %v578
    %v618 = vunpack.c.l.b16 %v579
    %v619 = vunpack.c.l.b16 %v580
    %v620 = vunpack.c.l.b16 %v581
    %v621 = vunpack.c.l.b16 %v582
    %v622 = vunpack.c.l.b16 %v583
    %v623 = vunpack.c.l.b16 %v584
    %v624 = vunpack.c.l.b16 %v585
    %v625 = vunpack.c.l.b16 %v586
    %v626 = vunpack.c.l.b16 %v587
    %v627 = vunpack.c.l.b16 %v588
    %v628 = vpack.c.b16 %v613, %v612
    %v629 = vpack.c.b16 %v615, %v614
    %v630 = vpack.c.b16 %v617, %v616
    %v631 = vpack.c.b16 %v619, %v618
    %v632 = vpack.c.b16 %v621, %v620
    %v633 = vpack.c.b16 %v623, %v622
    %v634 = vpack.c.b16 %v625, %v624
    %v635 = vpack.c.b16 %v627, %v626
    %644 = vmatprep.subr.bf16.mxu0 0
    %645 = vmatpush1.bf16.msra.mxu0 %v628
    %646 = vmatprep.subr.bf16.mxu0 0
    %647 = vmatpush1.bf16.msra.mxu0 %v629
    %648 = vmatprep.subr.bf16.mxu0 0
    %649 = vmatpush1.bf16.msra.mxu0 %v630
    %650 = vmatprep.subr.bf16.mxu0 0
    %651 = vmatpush1.bf16.msra.mxu0 %v631
    %652 = vmatprep.subr.bf16.mxu0 0
    %653 = vmatpush1.bf16.msra.mxu0 %v632
    %654 = vmatprep.subr.bf16.mxu0 0
    %655 = vmatpush1.bf16.msra.mxu0 %v633
    %656 = vmatprep.subr.bf16.mxu0 0
    %657 = vmatpush1.bf16.msra.mxu0 %v634
    %658 = vmatprep.subr.bf16.mxu0 0
    %659 = vmatpush1.bf16.msra.mxu0 %v635
    %660 = vmatprep.subr.bf16.mxu0 0
    %661 = vmatpush1.bf16.msra.mxu0 0
    %662 = vmatprep.subr.bf16.mxu0 0
    %663 = vmatpush1.bf16.msra.mxu0 0
    %664 = vmatprep.subr.bf16.mxu0 0
    %665 = vmatpush1.bf16.msra.mxu0 0
    %666 = vmatprep.subr.bf16.mxu0 0
    %667 = vmatpush1.bf16.msra.mxu0 0
    %668 = vmatprep.subr.bf16.mxu0 0
    %669 = vmatpush1.bf16.msra.mxu0 0
    %670 = vmatprep.subr.bf16.mxu0 0
    %671 = vmatpush1.bf16.msra.mxu0 0
    %672 = vmatprep.subr.bf16.mxu0 0
    %673 = vmatpush1.bf16.msra.mxu0 0
    %674 = vmatprep.subr.bf16.mxu0 0
    %675 = vmatpush1.bf16.msra.mxu0 0
    %676 = vmatprep.mubr.bf16.mxu0 0
    %677 = vmatmul.mubr.bf16.gmra.mrb[0].mxu0 %v572
    %v678 = vpop.f32.mrb[0].mxu0
    %v679 = vadd.f32 %v594, %v678
    %v680 = vpop.f32.mrb[0].mxu0
    %v681 = vpop.f32.mrb[0].mxu0
    %v682 = vpop.f32.mrb[0].mxu0
    %683 = vdwg.mxu0
    %684 = vst [vmem:[#allocation13] sm:$0xff] %v679
    // Predicated region
    $region70: #{tpu_custom_call.1} parent=1 // pred_check
      _
    $region71: #{tpu_custom_call.1} parent=1 // pred_check_branch
      %686 = sbr.rel (0) target = $region73
    $region72: #{tpu_custom_call.1} parent=1 // pred_region
      %s688 = ssub.s32 128, 128
      %689 = vsyncadd [#allocation4], %s688
      %s691 = sshll.u32 [#allocation13], 4
      %s692 = int_to_ptr.vmem [resolvable:$true] %s691
      %694 = dma.vmem_to_hbm [thread:$0]  %s692, 128, %s11, [#allocation4]
    $region73: #{tpu_custom_call.1} parent=1 // pred_fallthru
      _
    // Predicated region
    $region74: #{tpu_custom_call.1} parent=1 // pred_check
      _
    $region75: #{tpu_custom_call.1} parent=1 // pred_check_branch
      %696 = sbr.rel (0) target = $region77
    $region76: #{tpu_custom_call.1} parent=1 // pred_region
      %697 = dma.done [#allocation4], 128
    $region77: #{tpu_custom_call.1} parent=1 // pred_fallthru
      _
    %698 = vsyncpa [#allocation3], 1
    %699 = vsyncpa [#allocation6], 1
    %700 = vsyncpa [#allocation9], 1
    %701 = vsyncpa [#allocation12], 1
    %702 = vsyncpa [#allocation4], 1

</llo_original>
